<compile_context>
chip_gen: v6e
topology: v6e:2x2x1
jax: 0.10.0
libtpu: 0.0.40
codegen_flags: <defaults>
</compile_context>

<pallas_src>
import jax
import jax.numpy as jnp
from jax.experimental import pallas as pl
from jax.experimental.pallas import tpu as pltpu


def make_fused_conv_kernel(activations):
    """Conv3x3 (as im2col matmul) + bias + per-branch activation."""
    num_branches = len(activations)

    def kernel(col_ref, w_ref, b_ref, o_ref):
        # col_ref: (1, 9, HW)  im2col of one padded input image (shared).
        # w_ref  : (1, C, 9)   this branch's conv weights, tap order kh*3+kw.
        # b_ref  : (1, C, 1)   this branch's bias.
        # o_ref  : (1, C, HW)  lane-dense output block (HW multiple of 128).
        col = col_ref[0]                      # (9, HW)
        w = w_ref[0]                          # (C, 9)
        acc = jnp.dot(
            w, col,
            preferred_element_type=jnp.float32,
            precision=jax.lax.Precision.HIGHEST,
        )                                     # (C, HW) on the MXU
        acc = acc + b_ref[0]                  # (C, 1) lane-broadcast bias

        branch = pl.program_id(0)
        # Branch-free select: all activations traced (cheap; EUP/VPU are idle),
        # result picked by the branch index. Avoids control-flow lowering.
        out = activations[0](acc)
        for idx in range(1, num_branches):
            out = jnp.where(branch == idx, activations[idx](acc), out)
        o_ref[0] = out

    return kernel


def concat_block_forward(x_nchw, params, activations):
    """ConcatBlock.forward: cat([act_b(conv_b(x)) for each branch], dim=0)."""
    N, Cin, H, W = x_nchw.shape
    assert Cin == 1, "ConvBlock uses Conv2d(1, 20, ...)"
    HW = H * W
    B = len(params)
    C = params[0][0].shape[0]

    # 'same' padding for a 3x3 kernel + im2col gather -> (N, 9, HW).
    # Pure layout plumbing on a tiny array; XLA fuses pad + shifted slices and
    # the kernel reads this operand exactly once per image.
    x = x_nchw[:, 0]                                        # (N, H, W)
    xp = jnp.pad(x, ((0, 0), (1, 1), (1, 1)))               # (N, H+2, W+2)
    taps = [
        xp[:, kh:kh + H, kw:kw + W].reshape(N, 1, HW)
        for kh in range(3) for kw in range(3)
    ]
    col = jnp.concatenate(taps, axis=1)                     # (N, 9, HW)

    # Pack per-branch weights/biases: (B, C, 9) / (B, C, 1). Tap order kh*3+kw
    # matches the im2col row order above.
    wk = jnp.stack([w[:, 0].reshape(C, 9) for w, _ in params])
    bk = jnp.stack([b.reshape(C, 1) for _, b in params])

    kernel = make_fused_conv_kernel(activations)
    out = pl.pallas_call(
        kernel,
        out_shape=jax.ShapeDtypeStruct((B * N, C, HW), jnp.float32),
        grid=(B, N),
        in_specs=[
            # Input im2col: shared across branches (re-read only when n moves).
            pl.BlockSpec((1, 9, HW), lambda b, n: (n, 0, 0)),
            # Weights/bias: constant across the inner n axis -> no re-DMA.
            pl.BlockSpec((1, C, 9), lambda b, n: (b, 0, 0)),
            pl.BlockSpec((1, C, 1), lambda b, n: (b, 0, 0)),
        ],
        # Write each (branch, image) block directly at its concat position.
        out_specs=pl.BlockSpec((1, C, HW), lambda b, n: (b * N + n, 0, 0)),
        compiler_params=pltpu.CompilerParams(
            dimension_semantics=("parallel", "parallel")),
    )(col, wk, bk)
    # TODO(synk): if H*W is ever scaled up, add a spatial tile axis over HW to
    # the grid and set vmem_limit_bytes explicitly (v7x has only 64 MiB VMEM).

    # Row-major reshape (free) back to NCHW concat layout.
    return out.reshape(B * N, C, H, W)


def reference_forward(x_nchw, params, activations):
    """Pure-JAX reference (lax conv) for correctness checking."""
    outs = []
    for (w, b), act in zip(params, activations):
        y = jax.lax.conv_general_dilated(
            x_nchw, w, window_strides=(1, 1), padding="SAME",
            dimension_numbers=("NCHW", "OIHW", "NCHW"),
            precision=jax.lax.Precision.HIGHEST)
        y = y + b.reshape(1, -1, 1, 1)
        outs.append(act(y))
    return jnp.concatenate(outs, axis=0)


if __name__ == "__main__":
    key = jax.random.PRNGKey(0)

    # Small, module-consistent shapes: batch=2, C_in=1, 16x16 spatial, C_out=20.
    N, H, W = 2, 16, 16
    C_OUT = 20

    def relu(v):
        return jnp.maximum(v, 0.0)          # nn.ReLU

    def sigmoid(v):
        return 1.0 / (1.0 + jnp.exp(-v))    # nn.Sigmoid

    activations = [relu, sigmoid]

    # Deterministic parameter init per branch: Conv2d(1, 20, (3,3)).
    params = []
    for _ in range(len(activations)):
        key, kw_key, kb_key = jax.random.split(key, 3)
        w = 0.1 * jax.random.normal(kw_key, (C_OUT, 1, 3, 3), jnp.float32)
        b = 0.1 * jax.random.normal(kb_key, (C_OUT,), jnp.float32)
        params.append((w, b))

    key, kx = jax.random.split(key)
    x = jax.random.normal(kx, (N, 1, H, W), jnp.float32)

    out = jax.block_until_ready(concat_block_forward(x, params, activations))
    assert out.shape == (len(activations) * N, C_OUT, H, W), out.shape

    ref = jax.block_until_ready(reference_forward(x, params, activations))
    assert jnp.allclose(out, ref, atol=1e-5, rtol=1e-5), (
        float(jnp.max(jnp.abs(out - ref))))

    print("KERNEL_OK")
</pallas_src>

<mosaic_0001>
module attributes {stable_mosaic.version = 11 : i64} {
  func.func @kernel(%arg0: i32, %arg1: i32, %arg2: memref<1x9x256xf32, #tpu.memory_space<vmem>>, %arg3: memref<1x20x9xf32, #tpu.memory_space<vmem>>, %arg4: memref<1x20x1xf32, #tpu.memory_space<vmem>>, %arg5: memref<1x20x256xf32, #tpu.memory_space<vmem>>) attributes {dimension_semantics = [#tpu.dimension_semantics<parallel>, #tpu.dimension_semantics<parallel>], iteration_bounds = array<i64: 2, 2>, scalar_prefetch = 0 : i64, scratch_operands = 0 : i64, tpu.core_type = #tpu.core_type<tc>, window_params = [{transform_indices = @transform_0, window_bounds = array<i64: 1, 9, 256>}, {transform_indices = @transform_1, window_bounds = array<i64: 1, 20, 9>}, {transform_indices = @transform_2, window_bounds = array<i64: 1, 20, 1>}, {transform_indices = @transform_3, window_bounds = array<i64: 1, 20, 256>}]} {
    %c0 = arith.constant 0 : index
    %c0_0 = arith.constant 0 : index
    %c0_1 = arith.constant 0 : index
    %0 = vector.load %arg2[%c0, %c0_0, %c0_1] : memref<1x9x256xf32, #tpu.memory_space<vmem>>, vector<1x9x256xf32>
    %1 = vector.shape_cast %0 : vector<1x9x256xf32> to vector<9x256xf32>
    %c0_2 = arith.constant 0 : index
    %c0_3 = arith.constant 0 : index
    %c0_4 = arith.constant 0 : index
    %2 = vector.load %arg3[%c0_2, %c0_3, %c0_4] : memref<1x20x9xf32, #tpu.memory_space<vmem>>, vector<1x20x9xf32>
    %3 = vector.shape_cast %2 : vector<1x20x9xf32> to vector<20x9xf32>
    %cst = arith.constant dense<0.000000e+00> : vector<20x256xf32>
    %4 = tpu.matmul %3, %1, %cst {dimension_numbers = #tpu.dot_dimension_numbers<[1], [0], [0], [1], [0, 0, 1, 1], [], []>, precision = #tpu.contract_precision<fp32>} : vector<20x9xf32>, vector<9x256xf32>, vector<20x256xf32> -> vector<20x256xf32>
    %c0_5 = arith.constant 0 : index
    %c0_6 = arith.constant 0 : index
    %c0_7 = arith.constant 0 : index
    %5 = vector.load %arg4[%c0_5, %c0_6, %c0_7] : memref<1x20x1xf32, #tpu.memory_space<vmem>>, vector<1x20x1xf32>
    %6 = vector.shape_cast %5 : vector<1x20x1xf32> to vector<20x1xf32>
    %7 = vector.broadcast %6 : vector<20x1xf32> to vector<20x256xf32>
    %8 = arith.addf %4, %7 : vector<20x256xf32>
    %cst_8 = arith.constant 0.000000e+00 : f32
    %9 = vector.broadcast %cst_8 : f32 to vector<20x256xf32>
    %10 = arith.maximumf %8, %9 : vector<20x256xf32>
    %c1_i32 = arith.constant 1 : i32
    %11 = arith.cmpi eq, %arg0, %c1_i32 : i32
    %cst_9 = arith.constant 0.000000e+00 : f32
    %12 = vector.broadcast %cst_9 : f32 to vector<20x256xf32>
    %13 = arith.subf %12, %8 : vector<20x256xf32>
    %14 = math.exp %13 : vector<20x256xf32>
    %cst_10 = arith.constant 1.000000e+00 : f32
    %15 = vector.broadcast %cst_10 : f32 to vector<20x256xf32>
    %16 = arith.addf %15, %14 : vector<20x256xf32>
    %cst_11 = arith.constant 1.000000e+00 : f32
    %17 = vector.broadcast %cst_11 : f32 to vector<20x256xf32>
    %18 = arith.divf %17, %16 : vector<20x256xf32>
    %19 = arith.select %11, %18, %10 : vector<20x256xf32>
    %c0_12 = arith.constant 0 : index
    %c0_13 = arith.constant 0 : index
    %c0_14 = arith.constant 0 : index
    %20 = vector.load %arg5[%c0_12, %c0_13, %c0_14] : memref<1x20x256xf32, #tpu.memory_space<vmem>>, vector<1x20x256xf32>
    %21 = vector.shape_cast %20 : vector<1x20x256xf32> to vector<20x256xf32>
    %22 = vector.shape_cast %19 : vector<20x256xf32> to vector<1x20x256xf32>
    tpu.vector_store %arg5[%c0_12, %c0_13, %c0_14], %22 {strides = array<i32>} : memref<1x20x256xf32, #tpu.memory_space<vmem>>, vector<1x20x256xf32>,
    return
  }
  func.func @transform_0(%arg0: i32, %arg1: i32) -> (i32, i32, i32) {
    %c0_i32 = arith.constant 0 : i32
    %c0_i32_0 = arith.constant 0 : i32
    %c0_i32_1 = arith.constant 0 : i32
    return %arg1, %c0_i32, %c0_i32_0 : i32, i32, i32
  }
  func.func @transform_1(%arg0: i32, %arg1: i32) -> (i32, i32, i32) {
    %c0_i32 = arith.constant 0 : i32
    %c0_i32_0 = arith.constant 0 : i32
    %c0_i32_1 = arith.constant 0 : i32
    return %arg0, %c0_i32, %c0_i32_0 : i32, i32, i32
  }
  func.func @transform_2(%arg0: i32, %arg1: i32) -> (i32, i32, i32) {
    %c0_i32 = arith.constant 0 : i32
    %c0_i32_0 = arith.constant 0 : i32
    %c0_i32_1 = arith.constant 0 : i32
    return %arg0, %c0_i32, %c0_i32_0 : i32, i32, i32
  }
  func.func @transform_3(%arg0: i32, %arg1: i32) -> (i32, i32, i32) {
    %c2_i32 = arith.constant 2 : i32
    %0 = arith.muli %arg0, %c2_i32 : i32
    %1 = arith.addi %0, %arg1 : i32
    %c0_i32 = arith.constant 0 : i32
    %c0_i32_0 = arith.constant 0 : i32
    %c0_i32_1 = arith.constant 0 : i32
    return %1, %c0_i32, %c0_i32_0 : i32, i32, i32
  }
}

</mosaic_0001>

<llo_original>
// kernel: tpu_custom_call.1
$region0: #{tpu_custom_call.1}
  #allocation0 [shape = 'u32[]', space=smem, size = 0x4, offset = 0x4, fixed_abs, tag = 'smem constant byte address 0x4 - core index']
  #allocation1 [shape = 'u32[144,128]{1,0:T(1,128)}', space=vmem, size = 0x12000, scoped, tag = 'internal scratch']
  %s0 = inlined_call_operand.vmem [shape: f32[2,9,256], index: 0, kind: input, shape index: {}]
  %s1 = inlined_call_operand.vmem [shape: f32[2,20,9], index: 1, kind: input, shape index: {}]
  %s2 = inlined_call_operand.vmem [shape: f32[2,20,1], index: 2, kind: input, shape index: {}]
  %s3 = inlined_call_operand.vmem [shape: f32[4,20,256], index: 3, kind: output, shape index: {}]
  %s4 = sld [smem:[#allocation0]]
  $region45: #{tpu_custom_call.1} parent=0
    _
  %s6 = ssub.s32 1, %s4
  %s7 = scalar_select 0, %s6, %s4
  loop: start=0, step=1, limit=6
  $region2: #{tpu_custom_call.1} parent=0 // loop_pre_header
    _
  $region3: #{tpu_custom_call.1} parent=0 // loop_header
    %s9 = sphi 0, %s13
    %p10 = scmp.ge.s32.totalorder %s9, 6
    %s16 = sphi 0, %s28
    %s17 = sphi 0, %s24
    %s18 = sphi 0, %s16
    %s19 = sphi 0, %s17
    %s20 = sphi 0, %s18
    %s21 = sphi 0, %s19
    %s31 = sphi 0, %s33
    %s34 = sphi 0, %s31
    %s35 = sphi 0, %s34
    %s51 = sphi 0, %s35
    %s57 = sphi 0, %s59
    %s60 = sphi 0, %s57
    %s61 = sphi 0, %s60
    %s77 = sphi 0, %s61
    %s83 = sphi 0, %s85
    %s86 = sphi 0, %s83
    %s87 = sphi 0, %s86
    %s103 = sphi 0, %s87
    %s113 = sphi 0, %s115
    %s116 = sphi 0, %s113
    %s117 = sphi 0, %s116
    %s133 = sphi 0, %s117
  $region4: #{tpu_custom_call.1} parent=0 // loop_header_branch
    %12 = sbr.rel (%p10) target = $region8
  $region5: #{tpu_custom_call.1} parent=0 // loop_body
    %s14 = ssub.s32 %s9, 1
    %s15 = ssub.s32 %s9, 2
    %s22 = sadd.s32 1, %s17
    %p23 = scmp.ge.s32.totalorder %s22, 2
    %s24 = scalar_select %p23, 0, %s22
    %s25 = sadd.s32 1, %s16
    %s26 = scalar_select %p23, %s25, %s16
    %p27 = scmp.ge.s32.totalorder %s26, 2
    %s28 = scalar_select %p27, 0, %s26
    %s29 = ssub.s32 %s17, %s24
    %p30 = scmp.eq.s32.totalorder %s29, 0
    %s32 = sadd.s32 %s31, 1
    %s33 = scalar_select %p30, %s31, %s32
    %p36 = pneg %p30
    %p37 = scmp.eq.s32.totalorder %s9, 3
    %p38 = por %p36, %p37
    %p39 = scmp.ne.s32.totalorder %s31, %s34
    %p40 = scmp.eq.s32.totalorder %s9, 0
    %p41 = por %p39, %p40
    %p42 = scmp.ne.s32.totalorder %s31, %s34
    %p43 = scmp.eq.s32.totalorder %s14, 3
    %p44 = por %p42, %p43
    %p45 = scmp.ne.s32.totalorder %s34, %s35
    %p46 = scmp.eq.s32.totalorder %s14, 0
    %p47 = por %p45, %p46
    %p48 = scmp.ne.s32.totalorder %s34, %s35
    %p49 = scmp.eq.s32.totalorder %s15, 3
    %p50 = por %p48, %p49
    %p52 = scmp.ne.s32.totalorder %s35, %s51
    %p53 = scmp.eq.s32.totalorder %s15, 0
    %p54 = por %p52, %p53
    %s55 = ssub.s32 %s16, %s28
    %p56 = scmp.eq.s32.totalorder %s55, 0
    %s58 = sadd.s32 %s57, 1
    %s59 = scalar_select %p56, %s57, %s58
    %p62 = pneg %p56
    %p63 = scmp.eq.s32.totalorder %s9, 3
    %p64 = por %p62, %p63
    %p65 = scmp.ne.s32.totalorder %s57, %s60
    %p66 = scmp.eq.s32.totalorder %s9, 0
    %p67 = por %p65, %p66
    %p68 = scmp.ne.s32.totalorder %s57, %s60
    %p69 = scmp.eq.s32.totalorder %s14, 3
    %p70 = por %p68, %p69
    %p71 = scmp.ne.s32.totalorder %s60, %s61
    %p72 = scmp.eq.s32.totalorder %s14, 0
    %p73 = por %p71, %p72
    %p74 = scmp.ne.s32.totalorder %s60, %s61
    %p75 = scmp.eq.s32.totalorder %s15, 3
    %p76 = por %p74, %p75
    %p78 = scmp.ne.s32.totalorder %s61, %s77
    %p79 = scmp.eq.s32.totalorder %s15, 0
    %p80 = por %p78, %p79
    %s81 = ssub.s32 %s16, %s28
    %p82 = scmp.eq.s32.totalorder %s81, 0
    %s84 = sadd.s32 %s83, 1
    %s85 = scalar_select %p82, %s83, %s84
    %p88 = pneg %p82
    %p89 = scmp.eq.s32.totalorder %s9, 3
    %p90 = por %p88, %p89
    %p91 = scmp.ne.s32.totalorder %s83, %s86
    %p92 = scmp.eq.s32.totalorder %s9, 0
    %p93 = por %p91, %p92
    %p94 = scmp.ne.s32.totalorder %s83, %s86
    %p95 = scmp.eq.s32.totalorder %s14, 3
    %p96 = por %p94, %p95
    %p97 = scmp.ne.s32.totalorder %s86, %s87
    %p98 = scmp.eq.s32.totalorder %s14, 0
    %p99 = por %p97, %p98
    %p100 = scmp.ne.s32.totalorder %s86, %s87
    %p101 = scmp.eq.s32.totalorder %s15, 3
    %p102 = por %p100, %p101
    %p104 = scmp.ne.s32.totalorder %s87, %s103
    %p105 = scmp.eq.s32.totalorder %s15, 0
    %p106 = por %p104, %p105
    %s107 = smul.u32 %s16, 2
    %s108 = sadd.s32 %s107, %s17
    %s109 = smul.u32 %s28, 2
    %s110 = sadd.s32 %s109, %s24
    %s111 = ssub.s32 %s108, %s110
    %p112 = scmp.eq.s32.totalorder %s111, 0
    %s114 = sadd.s32 %s113, 1
    %s115 = scalar_select %p112, %s113, %s114
    %p118 = pneg %p112
    %p119 = scmp.eq.s32.totalorder %s9, 3
    %p120 = por %p118, %p119
    %p121 = scmp.ne.s32.totalorder %s113, %s116
    %p122 = scmp.eq.s32.totalorder %s9, 0
    %p123 = por %p121, %p122
    %p124 = scmp.ne.s32.totalorder %s113, %s116
    %p125 = scmp.eq.s32.totalorder %s14, 3
    %p126 = por %p124, %p125
    %p127 = scmp.ne.s32.totalorder %s116, %s117
    %p128 = scmp.eq.s32.totalorder %s14, 0
    %p129 = por %p127, %p128
    %p130 = scmp.ne.s32.totalorder %s116, %s117
    %p131 = scmp.eq.s32.totalorder %s15, 3
    %p132 = por %p130, %p131
    %p134 = scmp.ne.s32.totalorder %s117, %s133
    %p135 = scmp.eq.s32.totalorder %s15, 0
    %p136 = por %p134, %p135
    %p137 = scmp.le.s32.totalorder 1, %s9
    %p138 = scmp.lt.s32.totalorder %s9, 5
    %p139 = pnand %p137, %p138
    %p140 = pneg %p139
    // Predicated region
    $region9: #{tpu_custom_call.1} parent=5 // pred_check
      _
    $region10: #{tpu_custom_call.1} parent=5 // pred_check_branch
      %142 = sbr.rel (%p139) target = $region12
    $region11: #{tpu_custom_call.1} parent=5 // pred_region
      %s143 = ssub.s32 %s9, 1
    $region12: #{tpu_custom_call.1} parent=5 // pred_fallthru
      _
    %p144 = scmp.lt.s32.totalorder %s9, 4
    // Predicated region
    $region13: #{tpu_custom_call.1} parent=5 // pred_check
      %p145 = pneg %p144
    $region14: #{tpu_custom_call.1} parent=5 // pred_check_branch
      %147 = sbr.rel (%p145) target = $region16
    $region15: #{tpu_custom_call.1} parent=5 // pred_region
      // Predicated region
      $region17: #{tpu_custom_call.1} parent=15 // pred_check
        %p148 = pneg %p41
      $region18: #{tpu_custom_call.1} parent=15 // pred_check_branch
        %150 = sbr.rel (%p148) target = $region20
      $region19: #{tpu_custom_call.1} parent=15 // pred_region
        %p151 = scmp.lt.s32.totalorder %s17, 1
        %s152 = scalar_select %p151, %s17, 1
        %s153 = smul.addr %s152, 4
        %s154 = smul.addr %s153, 8
        %s155 = scalar_lea.vmem %s0, %s154
      $region20: #{tpu_custom_call.1} parent=15 // pred_fallthru
        _
      // Predicated region
      $region21: #{tpu_custom_call.1} parent=15 // pred_check
        %p156 = pneg %p67
      $region22: #{tpu_custom_call.1} parent=15 // pred_check_branch
        %158 = sbr.rel (%p156) target = $region24
      $region23: #{tpu_custom_call.1} parent=15 // pred_region
        %p159 = scmp.lt.s32.totalorder %s16, 1
        %s160 = scalar_select %p159, %s16, 1
        %s161 = smul.addr %s160, 3
        %s162 = smul.addr %s161, 8
        %s163 = scalar_lea.vmem %s1, %s162
      $region24: #{tpu_custom_call.1} parent=15 // pred_fallthru
        _
      // Predicated region
      $region25: #{tpu_custom_call.1} parent=15 // pred_check
        %p164 = pneg %p93
      $region26: #{tpu_custom_call.1} parent=15 // pred_check_branch
        %166 = sbr.rel (%p164) target = $region28
      $region27: #{tpu_custom_call.1} parent=15 // pred_region
        %p167 = scmp.lt.s32.totalorder %s16, 1
        %s168 = scalar_select %p167, %s16, 1
        %s169 = smul.addr %s168, 3
        %s170 = smul.addr %s169, 8
        %s171 = scalar_lea.vmem %s2, %s170
      $region28: #{tpu_custom_call.1} parent=15 // pred_fallthru
        _
    $region16: #{tpu_custom_call.1} parent=5 // pred_fallthru
      _
    %p172 = scmp.le.s32.totalorder 1, %s9
    %p173 = scmp.lt.s32.totalorder %s9, 5
    %p174 = pnand %p172, %p173
    %p175 = pneg %p174
    // Predicated region
    $region29: #{tpu_custom_call.1} parent=5 // pred_check
      _
    $region30: #{tpu_custom_call.1} parent=5 // pred_check_branch
      %177 = sbr.rel (%p174) target = $region32
    $region31: #{tpu_custom_call.1} parent=5 // pred_region
      %s178 = ssub.s32 %s9, 1
      %p179 = scmp.lt.s32.totalorder %s19, 1
      %s180 = scalar_select %p179, %s19, 1
      %s181 = smul.addr %s180, 4
      %s182 = smul.addr %s181, 8
      %s183 = scalar_lea.vmem %s0, %s182
      %p184 = pneg %p47
      %p185 = pneg %p44
      %p186 = scmp.lt.s32.totalorder %s18, 1
      %s187 = scalar_select %p186, %s18, 1
      %s188 = smul.addr %s187, 3
      %s189 = smul.addr %s188, 8
      %s190 = scalar_lea.vmem %s1, %s189
      %p191 = pneg %p73
      %p192 = pneg %p70
      %p193 = scmp.lt.s32.totalorder %s18, 1
      %s194 = scalar_select %p193, %s18, 1
      %s195 = smul.addr %s194, 3
      %s196 = smul.addr %s195, 8
      %s197 = scalar_lea.vmem %s2, %s196
      %p198 = pneg %p99
      %p199 = pneg %p96
      %p200 = pneg %p129
      %p201 = pneg %p126
      %s202 = smul.u32 %s18, 2
      %s203 = sadd.s32 %s202, %s19
      %p204 = scmp.lt.s32.totalorder %s203, 3
      %s205 = scalar_select %p204, %s203, 3
      %s206 = smul.addr %s205, 6
      %s207 = smul.addr %s206, 8
      %s208 = scalar_lea.vmem %s3, %s207
      %p209 = scmp.lt.s32.totalorder %s19, 1
      %s210 = scalar_select %p209, %s19, 1
      %s211 = smul.addr %s210, 4
      %s212 = smul.addr %s211, 8
      %s213 = scalar_lea.vmem %s0, %s212
      %p214 = scmp.lt.s32.totalorder %s18, 1
      %s215 = scalar_select %p214, %s18, 1
      %s216 = smul.addr %s215, 3
      %s217 = smul.addr %s216, 8
      %s218 = scalar_lea.vmem %s1, %s217
      %p219 = scmp.lt.s32.totalorder %s18, 1
      %s220 = scalar_select %p219, %s18, 1
      %s221 = smul.addr %s220, 3
      %s222 = smul.addr %s221, 8
      %s223 = scalar_lea.vmem %s2, %s222
      %s224 = smul.u32 %s18, 2
      %s225 = sadd.s32 %s224, %s19
      %p226 = scmp.lt.s32.totalorder %s225, 3
      %s227 = scalar_select %p226, %s225, 3
      %s228 = smul.addr %s227, 6
      %s229 = smul.addr %s228, 8
      %s230 = scalar_lea.vmem %s3, %s229
      %s231 = smul.u32 %s18, 2
      %s232 = sadd.s32 %s231, %s19
      %v233 = vld [vmem:[%s213] sm:$0xff]
      %v234 = vld [vmem:[%s213 + $0x8] sm:$0xff]
      %v235 = vld [vmem:[%s213 + $0x10] sm:$0x1]
      %v236 = vld [vmem:[%s213 + $0x18] sm:$0x1]
      %v237 = vld [vmem:[%s218] sm:$0xff]
      %v238 = vld [vmem:[%s218 + $0x8] sm:$0xff]
      %v239 = vld [vmem:[%s218 + $0x10] sm:$0xf]
      %v240 = vld [vmem:[%s223] sm:$0xff]
      %v241 = vld [vmem:[%s223 + $0x8] sm:$0xff]
      %v242 = vld [vmem:[%s223 + $0x10] sm:$0xf]
      %244 = vset.pattern.permute.xlu0 0
      %245 = vperm.xlu0 %244, %v240
      %v246 = vpop.permute.xlu0 %245
      %249 = vset.pattern.permute.xlu0 0
      %250 = vperm.xlu0 %249, %v241
      %v251 = vpop.permute.xlu0 %250
      %254 = vset.pattern.permute.xlu0 0
      %255 = vperm.xlu0 %254, %v242
      %v256 = vpop.permute.xlu0 %255
      %vm258 = vcmask 72704
      %v260 = vsel %vm258, %v237, 0
      %v263 = vsel %vm258, %v238, 0
      %v266 = vsel %vm258, %v239, 0
      %vm268 = vcmask 1040384
      %v270 = vsel %vm268, %v235, 0
      %v273 = vsel %vm268, %v236, 0
      %275 = vmatprep.subr.mxu0 0.0
      %276 = vmatpush1.msra.mxu0 0.0
      %277 = vmatprep.subr.mxu0 0.0
      %278 = vmatpush1.msra.mxu0 0.0
      %279 = vmatprep.subr.mxu0 0.0
      %280 = vmatpush1.msra.mxu0 0.0
      %281 = vmatprep.subr.mxu0 0.0
      %282 = vmatpush1.msra.mxu0 0.0
      %283 = vmatprep.subr.mxu0 0.0
      %284 = vmatpush1.msra.mxu0 0.0
      %285 = vmatprep.subr.mxu0 0.0
      %286 = vmatpush1.msra.mxu0 0.0
      %287 = vmatprep.subr.mxu0 0.0
      %288 = vmatpush1.msra.mxu0 0.0
      %289 = vmatprep.subr.mxu0 0.0
      %290 = vmatpush1.msra.mxu0 0.0
      %291 = vmatprep.subr.mxu0 0.0
      %292 = vmatpush1.msra.mxu0 0.0
      %293 = vmatprep.subr.mxu0 0.0
      %294 = vmatpush1.msra.mxu0 0.0
      %295 = vmatprep.subr.mxu0 0.0
      %296 = vmatpush1.msra.mxu0 0.0
      %297 = vmatprep.subr.mxu0 0.0
      %298 = vmatpush1.msra.mxu0 0.0
      %299 = vmatprep.subr.mxu0 0.0
      %300 = vmatpush1.msra.mxu0 0.0
      %301 = vmatprep.subr.mxu0 0.0
      %302 = vmatpush1.msra.mxu0 0.0
      %v303 = vand.u32 %v273, 4294901760
      %304 = vmatprep.subr.mxu0 %v303
      %v305 = vand.u32 %v270, 4294901760
      %306 = vmatpush1.msra.mxu0 %v305
      %v307 = vand.u32 %v234, 4294901760
      %308 = vmatprep.subr.mxu0 %v307
      %v309 = vand.u32 %v233, 4294901760
      %310 = vmatpush1.msra.mxu0 %v309
      %311 = vmatprep.subr.mxu0 0.0
      %312 = vmatpush2.msra.mxu0 0.0
      %313 = vmatprep.subr.mxu0 0.0
      %314 = vmatpush2.msra.mxu0 0.0
      %315 = vmatprep.subr.mxu0 0.0
      %316 = vmatpush2.msra.mxu0 0.0
      %317 = vmatprep.subr.mxu0 0.0
      %318 = vmatpush2.msra.mxu0 0.0
      %319 = vmatprep.subr.mxu0 0.0
      %320 = vmatpush2.msra.mxu0 0.0
      %321 = vmatprep.subr.mxu0 0.0
      %322 = vmatpush2.msra.mxu0 0.0
      %323 = vmatprep.subr.mxu0 0.0
      %324 = vmatpush2.msra.mxu0 0.0
      %325 = vmatprep.subr.mxu0 0.0
      %326 = vmatpush2.msra.mxu0 0.0
      %327 = vmatprep.subr.mxu0 0.0
      %328 = vmatpush2.msra.mxu0 0.0
      %329 = vmatprep.subr.mxu0 0.0
      %330 = vmatpush2.msra.mxu0 0.0
      %331 = vmatprep.subr.mxu0 0.0
      %332 = vmatpush2.msra.mxu0 0.0
      %333 = vmatprep.subr.mxu0 0.0
      %334 = vmatpush2.msra.mxu0 0.0
      %335 = vmatprep.subr.mxu0 0.0
      %336 = vmatpush2.msra.mxu0 0.0
      %337 = vmatprep.subr.mxu0 0.0
      %338 = vmatpush2.msra.mxu0 0.0
      %339 = vmatprep.subr.mxu0 0.0
      %340 = vmatpush2.msra.mxu0 0.0
      %341 = vmatprep.subr.mxu0 0.0
      %342 = vmatpush2.msra.mxu0 0.0
      %343 = vmatprep.mubr.f32.mxu0 0.0
      %v344 = vand.u32 %v260, 4294901760
      %v345 = vsub.f32 %v260, %v344
      %v346 = vand.u32 %v345, 4294901760
      %v347 = vsub.f32 %v345, %v346
      %v348 = vand.u32 %v347, 4294901760
      %349 = vmatmul.mubr.f32.gmra.mxu0 %v348
      %v350 = vpop.f32.mrf.mxu0
      %v351 = vadd.f32 %v246, %v350
      %v352 = vpop.f32.mrf.mxu0
      %v353 = vadd.f32 %v246, %v352
      %354 = vmatprep.mubr.f32.mxu0 0.0
      %v355 = vand.u32 %v263, 4294901760
      %v356 = vsub.f32 %v263, %v355
      %v357 = vand.u32 %v356, 4294901760
      %v358 = vsub.f32 %v356, %v357
      %v359 = vand.u32 %v358, 4294901760
      %360 = vmatmul.mubr.f32.gmra.mxu0 %v359
      %v361 = vpop.f32.mrf.mxu0
      %v362 = vadd.f32 %v251, %v361
      %v363 = vpop.f32.mrf.mxu0
      %v364 = vadd.f32 %v251, %v363
      %365 = vmatprep.mubr.f32.mxu0 0.0
      %v366 = vand.u32 %v266, 4294901760
      %v367 = vsub.f32 %v266, %v366
      %v368 = vand.u32 %v367, 4294901760
      %v369 = vsub.f32 %v367, %v368
      %v370 = vand.u32 %v369, 4294901760
      %371 = vmatmul.mubr.f32.gmra.mxu0 %v370
      %v372 = vpop.f32.mrf.mxu0
      %v373 = vadd.f32 %v256, %v372
      %v374 = vpop.f32.mrf.mxu0
      %v375 = vadd.f32 %v256, %v374
      %376 = vdwg.mxu0
      %377 = vmatprep.subr.mxu0 0.0
      %378 = vmatpush1.msra.mxu0 0.0
      %379 = vmatprep.subr.mxu0 0.0
      %380 = vmatpush1.msra.mxu0 0.0
      %381 = vmatprep.subr.mxu0 0.0
      %382 = vmatpush1.msra.mxu0 0.0
      %383 = vmatprep.subr.mxu0 0.0
      %384 = vmatpush1.msra.mxu0 0.0
      %385 = vmatprep.subr.mxu0 0.0
      %386 = vmatpush1.msra.mxu0 0.0
      %387 = vmatprep.subr.mxu0 0.0
      %388 = vmatpush1.msra.mxu0 0.0
      %389 = vmatprep.subr.mxu0 0.0
      %390 = vmatpush1.msra.mxu0 0.0
      %391 = vmatprep.subr.mxu0 0.0
      %392 = vmatpush1.msra.mxu0 0.0
      %393 = vmatprep.subr.mxu0 0.0
      %394 = vmatpush1.msra.mxu0 0.0
      %395 = vmatprep.subr.mxu0 0.0
      %396 = vmatpush1.msra.mxu0 0.0
      %397 = vmatprep.subr.mxu0 0.0
      %398 = vmatpush1.msra.mxu0 0.0
      %399 = vmatprep.subr.mxu0 0.0
      %400 = vmatpush1.msra.mxu0 0.0
      %401 = vmatprep.subr.mxu0 0.0
      %402 = vmatpush1.msra.mxu0 0.0
      %403 = vmatprep.subr.mxu0 0.0
      %404 = vmatpush1.msra.mxu0 0.0
      %v405 = vand.u32 %v273, 4294901760
      %v406 = vsub.f32 %v273, %v405
      %v407 = vand.u32 %v406, 4294901760
      %v408 = vsub.f32 %v406, %v407
      %v409 = vand.u32 %v408, 4294901760
      %410 = vmatprep.subr.mxu0 %v409
      %v411 = vand.u32 %v270, 4294901760
      %v412 = vsub.f32 %v270, %v411
      %v413 = vand.u32 %v412, 4294901760
      %v414 = vsub.f32 %v412, %v413
      %v415 = vand.u32 %v414, 4294901760
      %416 = vmatpush1.msra.mxu0 %v415
      %v417 = vand.u32 %v234, 4294901760
      %v418 = vsub.f32 %v234, %v417
      %v419 = vand.u32 %v418, 4294901760
      %v420 = vsub.f32 %v418, %v419
      %v421 = vand.u32 %v420, 4294901760
      %422 = vmatprep.subr.mxu0 %v421
      %v423 = vand.u32 %v233, 4294901760
      %v424 = vsub.f32 %v233, %v423
      %v425 = vand.u32 %v424, 4294901760
      %v426 = vsub.f32 %v424, %v425
      %v427 = vand.u32 %v426, 4294901760
      %428 = vmatpush1.msra.mxu0 %v427
      %429 = vmatprep.subr.mxu0 0.0
      %430 = vmatpush2.msra.mxu0 0.0
      %431 = vmatprep.subr.mxu0 0.0
      %432 = vmatpush2.msra.mxu0 0.0
      %433 = vmatprep.subr.mxu0 0.0
      %434 = vmatpush2.msra.mxu0 0.0
      %435 = vmatprep.subr.mxu0 0.0
      %436 = vmatpush2.msra.mxu0 0.0
      %437 = vmatprep.subr.mxu0 0.0
      %438 = vmatpush2.msra.mxu0 0.0
      %439 = vmatprep.subr.mxu0 0.0
      %440 = vmatpush2.msra.mxu0 0.0
      %441 = vmatprep.subr.mxu0 0.0
      %442 = vmatpush2.msra.mxu0 0.0
      %443 = vmatprep.subr.mxu0 0.0
      %444 = vmatpush2.msra.mxu0 0.0
      %445 = vmatprep.subr.mxu0 0.0
      %446 = vmatpush2.msra.mxu0 0.0
      %447 = vmatprep.subr.mxu0 0.0
      %448 = vmatpush2.msra.mxu0 0.0
      %449 = vmatprep.subr.mxu0 0.0
      %450 = vmatpush2.msra.mxu0 0.0
      %451 = vmatprep.subr.mxu0 0.0
      %452 = vmatpush2.msra.mxu0 0.0
      %453 = vmatprep.subr.mxu0 0.0
      %454 = vmatpush2.msra.mxu0 0.0
      %455 = vmatprep.subr.mxu0 0.0
      %456 = vmatpush2.msra.mxu0 0.0
      %457 = vmatprep.subr.mxu0 0.0
      %458 = vmatpush2.msra.mxu0 0.0
      %459 = vmatprep.subr.mxu0 0.0
      %460 = vmatpush2.msra.mxu0 0.0
      %461 = vmatprep.mubr.f32.mxu0 0.0
      %v462 = vand.u32 %v260, 4294901760
      %463 = vmatmul.mubr.f32.gmra.mxu0 %v462
      %v464 = vpop.f32.mrf.mxu0
      %v465 = vadd.f32 %v351, %v464
      %v466 = vpop.f32.mrf.mxu0
      %v467 = vadd.f32 %v353, %v466
      %468 = vmatprep.mubr.f32.mxu0 0.0
      %v469 = vand.u32 %v263, 4294901760
      %470 = vmatmul.mubr.f32.gmra.mxu0 %v469
      %v471 = vpop.f32.mrf.mxu0
      %v472 = vadd.f32 %v362, %v471
      %v473 = vpop.f32.mrf.mxu0
      %v474 = vadd.f32 %v364, %v473
      %475 = vmatprep.mubr.f32.mxu0 0.0
      %v476 = vand.u32 %v266, 4294901760
      %477 = vmatmul.mubr.f32.gmra.mxu0 %v476
      %v478 = vpop.f32.mrf.mxu0
      %v479 = vadd.f32 %v373, %v478
      %v480 = vpop.f32.mrf.mxu0
      %v481 = vadd.f32 %v375, %v480
      %482 = vdwg.mxu0
      %483 = vmatprep.subr.mxu0 0.0
      %484 = vmatpush1.msra.mxu0 0.0
      %485 = vmatprep.subr.mxu0 0.0
      %486 = vmatpush1.msra.mxu0 0.0
      %487 = vmatprep.subr.mxu0 0.0
      %488 = vmatpush1.msra.mxu0 0.0
      %489 = vmatprep.subr.mxu0 0.0
      %490 = vmatpush1.msra.mxu0 0.0
      %491 = vmatprep.subr.mxu0 0.0
      %492 = vmatpush1.msra.mxu0 0.0
      %493 = vmatprep.subr.mxu0 0.0
      %494 = vmatpush1.msra.mxu0 0.0
      %495 = vmatprep.subr.mxu0 0.0
      %496 = vmatpush1.msra.mxu0 0.0
      %497 = vmatprep.subr.mxu0 0.0
      %498 = vmatpush1.msra.mxu0 0.0
      %499 = vmatprep.subr.mxu0 0.0
      %500 = vmatpush1.msra.mxu0 0.0
      %501 = vmatprep.subr.mxu0 0.0
      %502 = vmatpush1.msra.mxu0 0.0
      %503 = vmatprep.subr.mxu0 0.0
      %504 = vmatpush1.msra.mxu0 0.0
      %505 = vmatprep.subr.mxu0 0.0
      %506 = vmatpush1.msra.mxu0 0.0
      %507 = vmatprep.subr.mxu0 0.0
      %508 = vmatpush1.msra.mxu0 0.0
      %509 = vmatprep.subr.mxu0 0.0
      %510 = vmatpush1.msra.mxu0 0.0
      %v511 = vand.u32 %v273, 4294901760
      %v512 = vsub.f32 %v273, %v511
      %513 = vmatprep.subr.mxu0 %v512
      %v514 = vand.u32 %v270, 4294901760
      %v515 = vsub.f32 %v270, %v514
      %516 = vmatpush1.msra.mxu0 %v515
      %v517 = vand.u32 %v234, 4294901760
      %v518 = vsub.f32 %v234, %v517
      %519 = vmatprep.subr.mxu0 %v518
      %v520 = vand.u32 %v233, 4294901760
      %v521 = vsub.f32 %v233, %v520
      %522 = vmatpush1.msra.mxu0 %v521
      %523 = vmatprep.subr.mxu0 0.0
      %524 = vmatpush2.msra.mxu0 0.0
      %525 = vmatprep.subr.mxu0 0.0
      %526 = vmatpush2.msra.mxu0 0.0
      %527 = vmatprep.subr.mxu0 0.0
      %528 = vmatpush2.msra.mxu0 0.0
      %529 = vmatprep.subr.mxu0 0.0
      %530 = vmatpush2.msra.mxu0 0.0
      %531 = vmatprep.subr.mxu0 0.0
      %532 = vmatpush2.msra.mxu0 0.0
      %533 = vmatprep.subr.mxu0 0.0
      %534 = vmatpush2.msra.mxu0 0.0
      %535 = vmatprep.subr.mxu0 0.0
      %536 = vmatpush2.msra.mxu0 0.0
      %537 = vmatprep.subr.mxu0 0.0
      %538 = vmatpush2.msra.mxu0 0.0
      %539 = vmatprep.subr.mxu0 0.0
      %540 = vmatpush2.msra.mxu0 0.0
      %541 = vmatprep.subr.mxu0 0.0
      %542 = vmatpush2.msra.mxu0 0.0
      %543 = vmatprep.subr.mxu0 0.0
      %544 = vmatpush2.msra.mxu0 0.0
      %545 = vmatprep.subr.mxu0 0.0
      %546 = vmatpush2.msra.mxu0 0.0
      %547 = vmatprep.subr.mxu0 0.0
      %548 = vmatpush2.msra.mxu0 0.0
      %549 = vmatprep.subr.mxu0 0.0
      %550 = vmatpush2.msra.mxu0 0.0
      %551 = vmatprep.subr.mxu0 0.0
      %552 = vmatpush2.msra.mxu0 0.0
      %553 = vmatprep.subr.mxu0 0.0
      %554 = vmatpush2.msra.mxu0 0.0
      %555 = vmatprep.mubr.f32.mxu0 0.0
      %v556 = vand.u32 %v260, 4294901760
      %v557 = vsub.f32 %v260, %v556
      %558 = vmatmul.mubr.f32.gmra.mxu0 %v557
      %v559 = vpop.f32.mrf.mxu0
      %v560 = vadd.f32 %v465, %v559
      %v561 = vpop.f32.mrf.mxu0
      %v562 = vadd.f32 %v467, %v561
      %563 = vmatprep.mubr.f32.mxu0 0.0
      %v564 = vand.u32 %v263, 4294901760
      %v565 = vsub.f32 %v263, %v564
      %566 = vmatmul.mubr.f32.gmra.mxu0 %v565
      %v567 = vpop.f32.mrf.mxu0
      %v568 = vadd.f32 %v472, %v567
      %v569 = vpop.f32.mrf.mxu0
      %v570 = vadd.f32 %v474, %v569
      %571 = vmatprep.mubr.f32.mxu0 0.0
      %v572 = vand.u32 %v266, 4294901760
      %v573 = vsub.f32 %v266, %v572
      %574 = vmatmul.mubr.f32.gmra.mxu0 %v573
      %v575 = vpop.f32.mrf.mxu0
      %v576 = vadd.f32 %v479, %v575
      %v577 = vpop.f32.mrf.mxu0
      %v578 = vadd.f32 %v481, %v577
      %579 = vdwg.mxu0
      %580 = vmatprep.subr.mxu0 0.0
      %581 = vmatpush1.msra.mxu0 0.0
      %582 = vmatprep.subr.mxu0 0.0
      %583 = vmatpush1.msra.mxu0 0.0
      %584 = vmatprep.subr.mxu0 0.0
      %585 = vmatpush1.msra.mxu0 0.0
      %586 = vmatprep.subr.mxu0 0.0
      %587 = vmatpush1.msra.mxu0 0.0
      %588 = vmatprep.subr.mxu0 0.0
      %589 = vmatpush1.msra.mxu0 0.0
      %590 = vmatprep.subr.mxu0 0.0
      %591 = vmatpush1.msra.mxu0 0.0
      %592 = vmatprep.subr.mxu0 0.0
      %593 = vmatpush1.msra.mxu0 0.0
      %594 = vmatprep.subr.mxu0 0.0
      %595 = vmatpush1.msra.mxu0 0.0
      %596 = vmatprep.subr.mxu0 0.0
      %597 = vmatpush1.msra.mxu0 0.0
      %598 = vmatprep.subr.mxu0 0.0
      %599 = vmatpush1.msra.mxu0 0.0
      %600 = vmatprep.subr.mxu0 0.0
      %601 = vmatpush1.msra.mxu0 0.0
      %602 = vmatprep.subr.mxu0 0.0
      %603 = vmatpush1.msra.mxu0 0.0
      %604 = vmatprep.subr.mxu0 0.0
      %605 = vmatpush1.msra.mxu0 0.0
      %606 = vmatprep.subr.mxu0 0.0
      %607 = vmatpush1.msra.mxu0 0.0
      %v608 = vand.u32 %v273, 4294901760
      %609 = vmatprep.subr.mxu0 %v608
      %v610 = vand.u32 %v270, 4294901760
      %611 = vmatpush1.msra.mxu0 %v610
      %v612 = vand.u32 %v234, 4294901760
      %613 = vmatprep.subr.mxu0 %v612
      %v614 = vand.u32 %v233, 4294901760
      %615 = vmatpush1.msra.mxu0 %v614
      %616 = vmatprep.subr.mxu0 0.0
      %617 = vmatpush2.msra.mxu0 0.0
      %618 = vmatprep.subr.mxu0 0.0
      %619 = vmatpush2.msra.mxu0 0.0
      %620 = vmatprep.subr.mxu0 0.0
      %621 = vmatpush2.msra.mxu0 0.0
      %622 = vmatprep.subr.mxu0 0.0
      %623 = vmatpush2.msra.mxu0 0.0
      %624 = vmatprep.subr.mxu0 0.0
      %625 = vmatpush2.msra.mxu0 0.0
      %626 = vmatprep.subr.mxu0 0.0
      %627 = vmatpush2.msra.mxu0 0.0
      %628 = vmatprep.subr.mxu0 0.0
      %629 = vmatpush2.msra.mxu0 0.0
      %630 = vmatprep.subr.mxu0 0.0
      %631 = vmatpush2.msra.mxu0 0.0
      %632 = vmatprep.subr.mxu0 0.0
      %633 = vmatpush2.msra.mxu0 0.0
      %634 = vmatprep.subr.mxu0 0.0
      %635 = vmatpush2.msra.mxu0 0.0
      %636 = vmatprep.subr.mxu0 0.0
      %637 = vmatpush2.msra.mxu0 0.0
      %638 = vmatprep.subr.mxu0 0.0
      %639 = vmatpush2.msra.mxu0 0.0
      %640 = vmatprep.subr.mxu0 0.0
      %641 = vmatpush2.msra.mxu0 0.0
      %642 = vmatprep.subr.mxu0 0.0
      %643 = vmatpush2.msra.mxu0 0.0
      %644 = vmatprep.subr.mxu0 0.0
      %645 = vmatpush2.msra.mxu0 0.0
      %646 = vmatprep.subr.mxu0 0.0
      %647 = vmatpush2.msra.mxu0 0.0
      %648 = vmatprep.mubr.f32.mxu0 0.0
      %v649 = vand.u32 %v260, 4294901760
      %v650 = vsub.f32 %v260, %v649
      %v651 = vand.u32 %v650, 4294901760
      %652 = vmatmul.mubr.f32.gmra.mxu0 %v651
      %v653 = vpop.f32.mrf.mxu0
      %v654 = vadd.f32 %v560, %v653
      %v655 = vpop.f32.mrf.mxu0
      %v656 = vadd.f32 %v562, %v655
      %657 = vmatprep.mubr.f32.mxu0 0.0
      %v658 = vand.u32 %v263, 4294901760
      %v659 = vsub.f32 %v263, %v658
      %v660 = vand.u32 %v659, 4294901760
      %661 = vmatmul.mubr.f32.gmra.mxu0 %v660
      %v662 = vpop.f32.mrf.mxu0
      %v663 = vadd.f32 %v568, %v662
      %v664 = vpop.f32.mrf.mxu0
      %v665 = vadd.f32 %v570, %v664
      %666 = vmatprep.mubr.f32.mxu0 0.0
      %v667 = vand.u32 %v266, 4294901760
      %v668 = vsub.f32 %v266, %v667
      %v669 = vand.u32 %v668, 4294901760
      %670 = vmatmul.mubr.f32.gmra.mxu0 %v669
      %v671 = vpop.f32.mrf.mxu0
      %v672 = vadd.f32 %v576, %v671
      %v673 = vpop.f32.mrf.mxu0
      %v674 = vadd.f32 %v578, %v673
      %675 = vdwg.mxu0
      %676 = vmatprep.subr.mxu0 0.0
      %677 = vmatpush1.msra.mxu0 0.0
      %678 = vmatprep.subr.mxu0 0.0
      %679 = vmatpush1.msra.mxu0 0.0
      %680 = vmatprep.subr.mxu0 0.0
      %681 = vmatpush1.msra.mxu0 0.0
      %682 = vmatprep.subr.mxu0 0.0
      %683 = vmatpush1.msra.mxu0 0.0
      %684 = vmatprep.subr.mxu0 0.0
      %685 = vmatpush1.msra.mxu0 0.0
      %686 = vmatprep.subr.mxu0 0.0
      %687 = vmatpush1.msra.mxu0 0.0
      %688 = vmatprep.subr.mxu0 0.0
      %689 = vmatpush1.msra.mxu0 0.0
      %690 = vmatprep.subr.mxu0 0.0
      %691 = vmatpush1.msra.mxu0 0.0
      %692 = vmatprep.subr.mxu0 0.0
      %693 = vmatpush1.msra.mxu0 0.0
      %694 = vmatprep.subr.mxu0 0.0
      %695 = vmatpush1.msra.mxu0 0.0
      %696 = vmatprep.subr.mxu0 0.0
      %697 = vmatpush1.msra.mxu0 0.0
      %698 = vmatprep.subr.mxu0 0.0
      %699 = vmatpush1.msra.mxu0 0.0
      %700 = vmatprep.subr.mxu0 0.0
      %701 = vmatpush1.msra.mxu0 0.0
      %702 = vmatprep.subr.mxu0 0.0
      %703 = vmatpush1.msra.mxu0 0.0
      %v704 = vand.u32 %v273, 4294901760
      %v705 = vsub.f32 %v273, %v704
      %v706 = vand.u32 %v705, 4294901760
      %707 = vmatprep.subr.mxu0 %v706
      %v708 = vand.u32 %v270, 4294901760
      %v709 = vsub.f32 %v270, %v708
      %v710 = vand.u32 %v709, 4294901760
      %711 = vmatpush1.msra.mxu0 %v710
      %v712 = vand.u32 %v234, 4294901760
      %v713 = vsub.f32 %v234, %v712
      %v714 = vand.u32 %v713, 4294901760
      %715 = vmatprep.subr.mxu0 %v714
      %v716 = vand.u32 %v233, 4294901760
      %v717 = vsub.f32 %v233, %v716
      %v718 = vand.u32 %v717, 4294901760
      %719 = vmatpush1.msra.mxu0 %v718
      %720 = vmatprep.subr.mxu0 0.0
      %721 = vmatpush2.msra.mxu0 0.0
      %722 = vmatprep.subr.mxu0 0.0
      %723 = vmatpush2.msra.mxu0 0.0
      %724 = vmatprep.subr.mxu0 0.0
      %725 = vmatpush2.msra.mxu0 0.0
      %726 = vmatprep.subr.mxu0 0.0
      %727 = vmatpush2.msra.mxu0 0.0
      %728 = vmatprep.subr.mxu0 0.0
      %729 = vmatpush2.msra.mxu0 0.0
      %730 = vmatprep.subr.mxu0 0.0
      %731 = vmatpush2.msra.mxu0 0.0
      %732 = vmatprep.subr.mxu0 0.0
      %733 = vmatpush2.msra.mxu0 0.0
      %734 = vmatprep.subr.mxu0 0.0
      %735 = vmatpush2.msra.mxu0 0.0
      %736 = vmatprep.subr.mxu0 0.0
      %737 = vmatpush2.msra.mxu0 0.0
      %738 = vmatprep.subr.mxu0 0.0
      %739 = vmatpush2.msra.mxu0 0.0
      %740 = vmatprep.subr.mxu0 0.0
      %741 = vmatpush2.msra.mxu0 0.0
      %742 = vmatprep.subr.mxu0 0.0
      %743 = vmatpush2.msra.mxu0 0.0
      %744 = vmatprep.subr.mxu0 0.0
      %745 = vmatpush2.msra.mxu0 0.0
      %746 = vmatprep.subr.mxu0 0.0
      %747 = vmatpush2.msra.mxu0 0.0
      %748 = vmatprep.subr.mxu0 0.0
      %749 = vmatpush2.msra.mxu0 0.0
      %750 = vmatprep.subr.mxu0 0.0
      %751 = vmatpush2.msra.mxu0 0.0
      %752 = vmatprep.mubr.f32.mxu0 0.0
      %v753 = vand.u32 %v260, 4294901760
      %754 = vmatmul.mubr.f32.gmra.mxu0 %v753
      %v755 = vpop.f32.mrf.mxu0
      %v756 = vadd.f32 %v654, %v755
      %v757 = vpop.f32.mrf.mxu0
      %v758 = vadd.f32 %v656, %v757
      %759 = vmatprep.mubr.f32.mxu0 0.0
      %v760 = vand.u32 %v263, 4294901760
      %761 = vmatmul.mubr.f32.gmra.mxu0 %v760
      %v762 = vpop.f32.mrf.mxu0
      %v763 = vadd.f32 %v663, %v762
      %v764 = vpop.f32.mrf.mxu0
      %v765 = vadd.f32 %v665, %v764
      %766 = vmatprep.mubr.f32.mxu0 0.0
      %v767 = vand.u32 %v266, 4294901760
      %768 = vmatmul.mubr.f32.gmra.mxu0 %v767
      %v769 = vpop.f32.mrf.mxu0
      %v770 = vadd.f32 %v672, %v769
      %v771 = vpop.f32.mrf.mxu0
      %v772 = vadd.f32 %v674, %v771
      %773 = vdwg.mxu0
      %774 = vmatprep.subr.mxu0 0.0
      %775 = vmatpush1.msra.mxu0 0.0
      %776 = vmatprep.subr.mxu0 0.0
      %777 = vmatpush1.msra.mxu0 0.0
      %778 = vmatprep.subr.mxu0 0.0
      %779 = vmatpush1.msra.mxu0 0.0
      %780 = vmatprep.subr.mxu0 0.0
      %781 = vmatpush1.msra.mxu0 0.0
      %782 = vmatprep.subr.mxu0 0.0
      %783 = vmatpush1.msra.mxu0 0.0
      %784 = vmatprep.subr.mxu0 0.0
      %785 = vmatpush1.msra.mxu0 0.0
      %786 = vmatprep.subr.mxu0 0.0
      %787 = vmatpush1.msra.mxu0 0.0
      %788 = vmatprep.subr.mxu0 0.0
      %789 = vmatpush1.msra.mxu0 0.0
      %790 = vmatprep.subr.mxu0 0.0
      %791 = vmatpush1.msra.mxu0 0.0
      %792 = vmatprep.subr.mxu0 0.0
      %793 = vmatpush1.msra.mxu0 0.0
      %794 = vmatprep.subr.mxu0 0.0
      %795 = vmatpush1.msra.mxu0 0.0
      %796 = vmatprep.subr.mxu0 0.0
      %797 = vmatpush1.msra.mxu0 0.0
      %798 = vmatprep.subr.mxu0 0.0
      %799 = vmatpush1.msra.mxu0 0.0
      %800 = vmatprep.subr.mxu0 0.0
      %801 = vmatpush1.msra.mxu0 0.0
      %v802 = vand.u32 %v273, 4294901760
      %803 = vmatprep.subr.mxu0 %v802
      %v804 = vand.u32 %v270, 4294901760
      %805 = vmatpush1.msra.mxu0 %v804
      %v806 = vand.u32 %v234, 4294901760
      %807 = vmatprep.subr.mxu0 %v806
      %v808 = vand.u32 %v233, 4294901760
      %809 = vmatpush1.msra.mxu0 %v808
      %810 = vmatprep.subr.mxu0 0.0
      %811 = vmatpush2.msra.mxu0 0.0
      %812 = vmatprep.subr.mxu0 0.0
      %813 = vmatpush2.msra.mxu0 0.0
      %814 = vmatprep.subr.mxu0 0.0
      %815 = vmatpush2.msra.mxu0 0.0
      %816 = vmatprep.subr.mxu0 0.0
      %817 = vmatpush2.msra.mxu0 0.0
      %818 = vmatprep.subr.mxu0 0.0
      %819 = vmatpush2.msra.mxu0 0.0
      %820 = vmatprep.subr.mxu0 0.0
      %821 = vmatpush2.msra.mxu0 0.0
      %822 = vmatprep.subr.mxu0 0.0
      %823 = vmatpush2.msra.mxu0 0.0
      %824 = vmatprep.subr.mxu0 0.0
      %825 = vmatpush2.msra.mxu0 0.0
      %826 = vmatprep.subr.mxu0 0.0
      %827 = vmatpush2.msra.mxu0 0.0
      %828 = vmatprep.subr.mxu0 0.0
      %829 = vmatpush2.msra.mxu0 0.0
      %830 = vmatprep.subr.mxu0 0.0
      %831 = vmatpush2.msra.mxu0 0.0
      %832 = vmatprep.subr.mxu0 0.0
      %833 = vmatpush2.msra.mxu0 0.0
      %834 = vmatprep.subr.mxu0 0.0
      %835 = vmatpush2.msra.mxu0 0.0
      %836 = vmatprep.subr.mxu0 0.0
      %837 = vmatpush2.msra.mxu0 0.0
      %838 = vmatprep.subr.mxu0 0.0
      %839 = vmatpush2.msra.mxu0 0.0
      %840 = vmatprep.subr.mxu0 0.0
      %841 = vmatpush2.msra.mxu0 0.0
      %842 = vmatprep.mubr.f32.mxu0 0.0
      %v843 = vand.u32 %v260, 4294901760
      %844 = vmatmul.mubr.f32.gmra.mxu0 %v843
      %v845 = vpop.f32.mrf.mxu0
      %v846 = vadd.f32 %v756, %v845
      %v847 = vpop.f32.mrf.mxu0
      %v848 = vadd.f32 %v758, %v847
      %849 = vmatprep.mubr.f32.mxu0 0.0
      %v850 = vand.u32 %v263, 4294901760
      %851 = vmatmul.mubr.f32.gmra.mxu0 %v850
      %v852 = vpop.f32.mrf.mxu0
      %v853 = vadd.f32 %v763, %v852
      %v854 = vpop.f32.mrf.mxu0
      %v855 = vadd.f32 %v765, %v854
      %856 = vmatprep.mubr.f32.mxu0 0.0
      %v857 = vand.u32 %v266, 4294901760
      %858 = vmatmul.mubr.f32.gmra.mxu0 %v857
      %v859 = vpop.f32.mrf.mxu0
      %v860 = vadd.f32 %v770, %v859
      %v861 = vpop.f32.mrf.mxu0
      %v862 = vadd.f32 %v772, %v861
      %863 = vdwg.mxu0
      %v864 = vmax.f32 %v846, 0.0
      %v865 = vmax.f32 %v848, 0.0
      %v866 = vmax.f32 %v853, 0.0
      %v867 = vmax.f32 %v855, 0.0
      %v868 = vmax.f32 %v860, 0.0
      %v869 = vmax.f32 %v862, 0.0
      %p870 = scmp.eq.s32.totalorder %s18, 1
      %v871 = vsub.f32 0.0, %v846
      %v872 = vsub.f32 0.0, %v848
      %v873 = vsub.f32 0.0, %v853
      %v874 = vsub.f32 0.0, %v855
      %v875 = vsub.f32 0.0, %v860
      %v876 = vsub.f32 0.0, %v862
      %v877 = vmul.f32 %v871, 1.442695
      %v878 = vpow.pop %v877
      %v879 = vmul.f32 %v872, 1.442695
      %v880 = vpow.pop %v879
      %v881 = vmul.f32 %v873, 1.442695
      %v882 = vpow.pop %v881
      %v883 = vmul.f32 %v874, 1.442695
      %v884 = vpow.pop %v883
      %v885 = vmul.f32 %v875, 1.442695
      %v886 = vpow.pop %v885
      %v887 = vmul.f32 %v876, 1.442695
      %v888 = vpow.pop %v887
      %v889 = vadd.f32 %v878, 1.0
      %v890 = vadd.f32 %v880, 1.0
      %v891 = vadd.f32 %v882, 1.0
      %v892 = vadd.f32 %v884, 1.0
      %v893 = vadd.f32 %v886, 1.0
      %v894 = vadd.f32 %v888, 1.0
      %v895 = vrcp.pop %v889
      %v896 = vmul.f32 1.0, %v895
      %v897 = vrcp.pop %v890
      %v898 = vmul.f32 1.0, %v897
      %v899 = vrcp.pop %v891
      %v900 = vmul.f32 1.0, %v899
      %v901 = vrcp.pop %v892
      %v902 = vmul.f32 1.0, %v901
      %v903 = vrcp.pop %v893
      %v904 = vmul.f32 1.0, %v903
      %v905 = vrcp.pop %v894
      %v906 = vmul.f32 1.0, %v905
      %s907 = scalar_select %p870, 1, 0
      %v908 = vstv %s907
      %vm909 = vcmp.eq.s32.totalorder %v908, 1
      %v910 = vsel %vm909, %v896, %v864
      %v911 = vsel %vm909, %v898, %v865
      %v912 = vsel %vm909, %v900, %v866
      %v913 = vsel %vm909, %v902, %v867
      %v914 = vsel %vm909, %v904, %v868
      %v915 = vsel %vm909, %v906, %v869
      %916 = vst [vmem:[%s230] sm:$0xff] %v910
      %917 = vst [vmem:[%s230 + $0x8] sm:$0xff] %v911
      %918 = vst [vmem:[%s230 + $0x10] sm:$0xff] %v912
      %919 = vst [vmem:[%s230 + $0x18] sm:$0xff] %v913
      %920 = vst [vmem:[%s230 + $0x20] sm:$0xf] %v914
      %921 = vst [vmem:[%s230 + $0x28] sm:$0xf] %v915
      %s922 = smul.u32 %s18, 2
      %s923 = sadd.s32 %s922, %s19
      %p924 = scmp.lt.s32.totalorder %s923, 3
      %s925 = scalar_select %p924, %s923, 3
      %s926 = smul.addr %s925, 6
      %s927 = smul.addr %s926, 8
      %s928 = scalar_lea.vmem %s3, %s927
      // Predicated region
      $region33: #{tpu_custom_call.1} parent=31 // pred_check
        %p929 = pneg %p126
      $region34: #{tpu_custom_call.1} parent=31 // pred_check_branch
        %931 = sbr.rel (%p929) target = $region36
      $region35: #{tpu_custom_call.1} parent=31 // pred_region
        %s932 = smul.u32 %s18, 2
        %s933 = sadd.s32 %s932, %s19
      $region36: #{tpu_custom_call.1} parent=31 // pred_fallthru
        _
    $region32: #{tpu_custom_call.1} parent=5 // pred_fallthru
      _
    %p934 = scmp.le.s32.totalorder 2, %s9
    // Predicated region
    $region37: #{tpu_custom_call.1} parent=5 // pred_check
      %p935 = pneg %p934
    $region38: #{tpu_custom_call.1} parent=5 // pred_check_branch
      %937 = sbr.rel (%p935) target = $region40
    $region39: #{tpu_custom_call.1} parent=5 // pred_region
      %s938 = ssub.s32 %s9, 2
      // Predicated region
      $region41: #{tpu_custom_call.1} parent=39 // pred_check
        %p939 = pneg %p132
      $region42: #{tpu_custom_call.1} parent=39 // pred_check_branch
        %941 = sbr.rel (%p939) target = $region44
      $region43: #{tpu_custom_call.1} parent=39 // pred_region
        %s942 = smul.u32 %s20, 2
        %s943 = sadd.s32 %s942, %s21
        %p944 = scmp.lt.s32.totalorder %s943, 3
        %s945 = scalar_select %p944, %s943, 3
        %s946 = smul.addr %s945, 6
        %s947 = smul.addr %s946, 8
        %s948 = scalar_lea.vmem %s3, %s947
      $region44: #{tpu_custom_call.1} parent=39 // pred_fallthru
        _
    $region40: #{tpu_custom_call.1} parent=5 // pred_fallthru
      _
  $region6: #{tpu_custom_call.1} parent=0 // loop_footer
    %s13 = sadd.s32 1, %s9
  $region7: #{tpu_custom_call.1} parent=0 // loop_footer_branch
    %8 = sbr.rel target = $region3
  $region8: #{tpu_custom_call.1} parent=0 // loop_exit
    _

</llo_original>
